<compile_context>
chip_gen: v7x
topology: tpu7x:2x2x1
jax: 0.10.0
libtpu: 0.0.40
codegen_flags: <defaults>
</compile_context>

<pallas_src>
import jax
import jax.numpy as jnp
import numpy as np
from jax.experimental import pallas as pl
from jax.experimental.pallas import tpu as pltpu

# ----------------------------- hyperparameters -----------------------------
NT_ENC_LEN = 64          # nt_encoding_length (after flatten)
HIDDEN_NT = 32           # hidden_neurons_nt
DEPTH_NT = 2             # depth_nt_window (number of nt linear layers)
EMB_SIZE = 16            # emb_size_tax
HIDDEN_MERGE = 32        # hidden_neurons_merge
NUM_LABELS = 1
VOCAB_SIZES = (11, 9, 8, 7, 6, 5, 4)   # species..kingdom


# ------------------------------- Pallas kernel ------------------------------
def netstart_kernel(x_ref, w1_ref, b1_ref, w2_ref, b2_ref,
                    emb_ref, wm_nt_ref, wm_emb_ref, bm_ref,
                    wc_t_ref, bc_ref, out_ref):
    # nt branch: two Linear + ReLU layers (dropout_1 == identity at inference)
    h = jnp.dot(x_ref[...], w1_ref[...],
                preferred_element_type=jnp.float32) + b1_ref[...]
    h = jnp.maximum(h, 0.0)
    h = jnp.dot(h.astype(jnp.bfloat16), w2_ref[...],
                preferred_element_type=jnp.float32) + b2_ref[...]
    h = jnp.maximum(h, 0.0)

    # merge layer: concat([hidden_nt, embeddings_tax]) @ Wm is computed as the
    # exact split matmul  h @ Wm_nt + emb @ Wm_emb  (avoids a lane-axis concat).
    m = (jnp.dot(h.astype(jnp.bfloat16), wm_nt_ref[...],
                 preferred_element_type=jnp.float32)
         + jnp.dot(emb_ref[...], wm_emb_ref[...],
                   preferred_element_type=jnp.float32)
         + bm_ref[...])
    m = jnp.maximum(m, 0.0)                     # dropout_2 == identity

    # classifier, computed transposed so the store is a lane-dense (1, TILE_B)
    # block instead of a masked (TILE_B, 1) store.
    logits = jax.lax.dot_general(
        wc_t_ref[...], m.astype(jnp.bfloat16),
        dimension_numbers=(((1,), (1,)), ((), ())),
        preferred_element_type=jnp.float32)
    out_ref[...] = logits + bc_ref[...]


def netstart_forward(x_nt, tax_ranks, params, tile_b=1024):
    """x_nt: (B, window, channels) f32; tax_ranks: (B, 7) int32."""
    B = x_nt.shape[0]
    x_flat = x_nt.reshape(B, -1).astype(jnp.bfloat16)     # (B, 64)

    # --- glue: single fused taxonomy embedding gather (7 tables concatenated,
    #           per-rank static offsets, padding rows are zero), summed over ranks.
    idx = tax_ranks.astype(jnp.int32) + params["emb_offsets"][None, :]   # (B, 7)
    emb_sum = jnp.take(params["emb_combined"], idx.reshape(-1), axis=0)
    emb_sum = emb_sum.reshape(B, 7, EMB_SIZE).sum(axis=1).astype(jnp.bfloat16)

    # --- batch tiling: lane-dense output needs TILE_B % 128 == 0; pad B up.
    tile_b = int(max(128, min(tile_b, pl.cdiv(B, 128) * 128)))
    num_tiles = pl.cdiv(B, tile_b)
    b_pad = num_tiles * tile_b
    if b_pad != B:
        x_flat = jnp.pad(x_flat, ((0, b_pad - B), (0, 0)))
        emb_sum = jnp.pad(emb_sum, ((0, b_pad - B), (0, 0)))

    args = (
        x_flat,
        params["w1"], params["b1"],
        params["w2"], params["b2"],
        emb_sum,
        params["wm_nt"], params["wm_emb"], params["bm"],
        params["wc_t"], params["bc"],
    )

    const = lambda i: (0, 0)          # weights/biases stay VMEM-resident
    in_specs = [
        pl.BlockSpec((tile_b, NT_ENC_LEN), lambda i: (i, 0)),    # x tile
        pl.BlockSpec((NT_ENC_LEN, HIDDEN_NT), const),            # w1
        pl.BlockSpec((1, HIDDEN_NT), const),                     # b1
        pl.BlockSpec((HIDDEN_NT, HIDDEN_NT), const),             # w2
        pl.BlockSpec((1, HIDDEN_NT), const),                     # b2
        pl.BlockSpec((tile_b, EMB_SIZE), lambda i: (i, 0)),      # emb tile
        pl.BlockSpec((HIDDEN_NT, HIDDEN_MERGE), const),          # wm_nt
        pl.BlockSpec((EMB_SIZE, HIDDEN_MERGE), const),           # wm_emb
        pl.BlockSpec((1, HIDDEN_MERGE), const),                  # bm
        pl.BlockSpec((1, HIDDEN_MERGE), const),                  # wc^T
        pl.BlockSpec((1, 1), const),                             # bc
    ]
    out_specs = pl.BlockSpec((1, tile_b), lambda i: (i, 0))

    flops_per_row = 2 * (NT_ENC_LEN * HIDDEN_NT + HIDDEN_NT * HIDDEN_NT
                         + HIDDEN_NT * HIDDEN_MERGE + EMB_SIZE * HIDDEN_MERGE
                         + HIDDEN_MERGE * NUM_LABELS)
    bytes_accessed = (sum(int(np.prod(a.shape)) * a.dtype.itemsize for a in args)
                      + b_pad * 4)    # + f32 output
    cost = pl.CostEstimate(flops=flops_per_row * b_pad, transcendentals=0,
                           bytes_accessed=bytes_accessed)

    out = pl.pallas_call(
        netstart_kernel,
        out_shape=jax.ShapeDtypeStruct((num_tiles, tile_b), jnp.float32),
        grid=(num_tiles,),
        in_specs=in_specs,
        out_specs=out_specs,
        compiler_params=pltpu.CompilerParams(
            dimension_semantics=("parallel",),        # megacore on v7x
            vmem_limit_bytes=32 * 1024 * 1024),       # safe on v5e/v6e/v7x
        cost_estimate=cost,
    )(*args)

    # (num_tiles, tile_b) lane-dense slab -> (B, 1)
    return out.reshape(-1)[:B].reshape(B, NUM_LABELS)


# ------------------------- deterministic parameter init ---------------------
def init_params(key):
    ks = jax.random.split(key, 16)
    p = {}
    # nt MLP layers (DEPTH_NT == 2); weights bf16, biases f32
    p["w1"] = (0.05 * jax.random.normal(ks[0], (NT_ENC_LEN, HIDDEN_NT))).astype(jnp.bfloat16)
    p["b1"] = 0.01 * jax.random.normal(ks[1], (1, HIDDEN_NT), jnp.float32)
    p["w2"] = (0.05 * jax.random.normal(ks[2], (HIDDEN_NT, HIDDEN_NT))).astype(jnp.bfloat16)
    p["b2"] = 0.01 * jax.random.normal(ks[3], (1, HIDDEN_NT), jnp.float32)
    # merge layer, split into nt-part and embedding-part of the concat
    p["wm_nt"] = (0.05 * jax.random.normal(ks[4], (HIDDEN_NT, HIDDEN_MERGE))).astype(jnp.bfloat16)
    p["wm_emb"] = (0.05 * jax.random.normal(ks[5], (EMB_SIZE, HIDDEN_MERGE))).astype(jnp.bfloat16)
    p["bm"] = 0.01 * jax.random.normal(ks[6], (1, HIDDEN_MERGE), jnp.float32)
    # classifier, stored transposed (1, HIDDEN_MERGE) for the lane-dense output path
    p["wc_t"] = (0.05 * jax.random.normal(ks[7], (NUM_LABELS, HIDDEN_MERGE))).astype(jnp.bfloat16)
    p["bc"] = 0.01 * jax.random.normal(ks[8], (1, NUM_LABELS), jnp.float32)
    # 7 taxonomy embedding tables (padding_idx=0 row zeroed), concatenated into
    # one table with per-rank offsets for a single fused gather.
    tables = []
    for i, v in enumerate(VOCAB_SIZES):
        t = 0.1 * jax.random.normal(ks[9 + i], (v, EMB_SIZE), jnp.float32)
        t = t.at[0].set(0.0)
        tables.append(t)
    p["emb_combined"] = jnp.concatenate(tables, axis=0)            # (sum(V), 16) f32
    p["emb_offsets"] = jnp.asarray(
        np.cumsum([0] + list(VOCAB_SIZES[:-1])), dtype=jnp.int32)  # (7,)
    return p


# ------------------------------ pure-JAX reference ---------------------------
def reference_forward(x_nt, tax_ranks, p):
    B = x_nt.shape[0]
    h = x_nt.reshape(B, -1).astype(jnp.bfloat16)
    h = jnp.maximum(jnp.dot(h, p["w1"], preferred_element_type=jnp.float32) + p["b1"], 0.0)
    h = jnp.maximum(jnp.dot(h.astype(jnp.bfloat16), p["w2"],
                            preferred_element_type=jnp.float32) + p["b2"], 0.0)
    idx = tax_ranks.astype(jnp.int32) + p["emb_offsets"][None, :]
    emb = jnp.take(p["emb_combined"], idx.reshape(-1), axis=0)
    emb = emb.reshape(B, 7, EMB_SIZE).sum(axis=1).astype(jnp.bfloat16)
    m = jnp.maximum(jnp.dot(h.astype(jnp.bfloat16), p["wm_nt"],
                            preferred_element_type=jnp.float32)
                    + jnp.dot(emb, p["wm_emb"], preferred_element_type=jnp.float32)
                    + p["bm"], 0.0)
    return jnp.dot(m.astype(jnp.bfloat16), p["wc_t"].T,
                   preferred_element_type=jnp.float32) + p["bc"]


if __name__ == "__main__":
    key = jax.random.PRNGKey(0)
    k_x, k_t, k_p = jax.random.split(key, 3)

    B, WINDOW, CHANNELS = 8, 16, 4          # WINDOW*CHANNELS == NT_ENC_LEN
    x_nt = jax.random.normal(k_x, (B, WINDOW, CHANNELS), jnp.float32)
    tax_ranks = jnp.stack(
        [jax.random.randint(jax.random.fold_in(k_t, j), (B,), 0, VOCAB_SIZES[j])
         for j in range(7)], axis=1).astype(jnp.int32)     # (B, 7)

    params = init_params(k_p)

    out = netstart_forward(x_nt, tax_ranks, params)
    out = jax.block_until_ready(out)

    ref = reference_forward(x_nt, tax_ranks, params)
    assert out.shape == (B, NUM_LABELS)
    assert jnp.allclose(out, ref, atol=1e-3, rtol=1e-3)

    print("KERNEL_OK")
</pallas_src>

<mosaic_0001>
module attributes {stable_mosaic.version = 11 : i64} {
  func.func @netstart_kernel(%arg0: i32, %arg1: memref<128x64xbf16, #tpu.memory_space<vmem>>, %arg2: memref<64x32xbf16, #tpu.memory_space<vmem>>, %arg3: memref<1x32xf32, #tpu.memory_space<vmem>>, %arg4: memref<32x32xbf16, #tpu.memory_space<vmem>>, %arg5: memref<1x32xf32, #tpu.memory_space<vmem>>, %arg6: memref<128x16xbf16, #tpu.memory_space<vmem>>, %arg7: memref<32x32xbf16, #tpu.memory_space<vmem>>, %arg8: memref<16x32xbf16, #tpu.memory_space<vmem>>, %arg9: memref<1x32xf32, #tpu.memory_space<vmem>>, %arg10: memref<1x32xbf16, #tpu.memory_space<vmem>>, %arg11: memref<1x1xf32, #tpu.memory_space<vmem>>, %arg12: memref<1x128xf32, #tpu.memory_space<vmem>>) attributes {dimension_semantics = [#tpu.dimension_semantics<parallel>], iteration_bounds = array<i64: 1>, scalar_prefetch = 0 : i64, scratch_operands = 0 : i64, tpu.core_type = #tpu.core_type<tc>, window_params = [{transform_indices = @transform_0, window_bounds = array<i64: 128, 64>}, {pipeline_mode = #tpu.pipeline_mode<synchronous>, transform_indices = @transform_1, window_bounds = array<i64: 64, 32>}, {pipeline_mode = #tpu.pipeline_mode<synchronous>, transform_indices = @transform_2, window_bounds = array<i64: 1, 32>}, {pipeline_mode = #tpu.pipeline_mode<synchronous>, transform_indices = @transform_3, window_bounds = array<i64: 32, 32>}, {pipeline_mode = #tpu.pipeline_mode<synchronous>, transform_indices = @transform_4, window_bounds = array<i64: 1, 32>}, {transform_indices = @transform_5, window_bounds = array<i64: 128, 16>}, {pipeline_mode = #tpu.pipeline_mode<synchronous>, transform_indices = @transform_6, window_bounds = array<i64: 32, 32>}, {pipeline_mode = #tpu.pipeline_mode<synchronous>, transform_indices = @transform_7, window_bounds = array<i64: 16, 32>}, {pipeline_mode = #tpu.pipeline_mode<synchronous>, transform_indices = @transform_8, window_bounds = array<i64: 1, 32>}, {pipeline_mode = #tpu.pipeline_mode<synchronous>, transform_indices = @transform_9, window_bounds = array<i64: 1, 32>}, {pipeline_mode = #tpu.pipeline_mode<synchronous>, transform_indices = @transform_10, window_bounds = array<i64: 1, 1>}, {transform_indices = @transform_11, window_bounds = array<i64: 1, 128>}]} {
    %c0 = arith.constant 0 : index
    %c0_0 = arith.constant 0 : index
    %0 = vector.load %arg1[%c0, %c0_0] : memref<128x64xbf16, #tpu.memory_space<vmem>>, vector<128x64xbf16>
    %c0_1 = arith.constant 0 : index
    %c0_2 = arith.constant 0 : index
    %1 = vector.load %arg2[%c0_1, %c0_2] : memref<64x32xbf16, #tpu.memory_space<vmem>>, vector<64x32xbf16>
    %cst = arith.constant dense<0.000000e+00> : vector<128x32xf32>
    %2 = tpu.matmul %0, %1, %cst {dimension_numbers = #tpu.dot_dimension_numbers<[1], [0], [0], [1], [0, 0, 1, 1], [], []>} : vector<128x64xbf16>, vector<64x32xbf16>, vector<128x32xf32> -> vector<128x32xf32>
    %c0_3 = arith.constant 0 : index
    %c0_4 = arith.constant 0 : index
    %3 = vector.load %arg3[%c0_3, %c0_4] : memref<1x32xf32, #tpu.memory_space<vmem>>, vector<1x32xf32>
    %4 = vector.broadcast %3 : vector<1x32xf32> to vector<128x32xf32>
    %5 = arith.addf %2, %4 : vector<128x32xf32>
    %cst_5 = arith.constant 0.000000e+00 : f32
    %6 = vector.broadcast %cst_5 : f32 to vector<128x32xf32>
    %7 = arith.maximumf %5, %6 : vector<128x32xf32>
    %8 = arith.truncf %7 : vector<128x32xf32> to vector<128x32xbf16>
    %c0_6 = arith.constant 0 : index
    %c0_7 = arith.constant 0 : index
    %9 = vector.load %arg4[%c0_6, %c0_7] : memref<32x32xbf16, #tpu.memory_space<vmem>>, vector<32x32xbf16>
    %cst_8 = arith.constant dense<0.000000e+00> : vector<128x32xf32>
    %10 = tpu.matmul %8, %9, %cst_8 {dimension_numbers = #tpu.dot_dimension_numbers<[1], [0], [0], [1], [0, 0, 1, 1], [], []>} : vector<128x32xbf16>, vector<32x32xbf16>, vector<128x32xf32> -> vector<128x32xf32>
    %c0_9 = arith.constant 0 : index
    %c0_10 = arith.constant 0 : index
    %11 = vector.load %arg5[%c0_9, %c0_10] : memref<1x32xf32, #tpu.memory_space<vmem>>, vector<1x32xf32>
    %12 = vector.broadcast %11 : vector<1x32xf32> to vector<128x32xf32>
    %13 = arith.addf %10, %12 : vector<128x32xf32>
    %cst_11 = arith.constant 0.000000e+00 : f32
    %14 = vector.broadcast %cst_11 : f32 to vector<128x32xf32>
    %15 = arith.maximumf %13, %14 : vector<128x32xf32>
    %16 = arith.truncf %15 : vector<128x32xf32> to vector<128x32xbf16>
    %c0_12 = arith.constant 0 : index
    %c0_13 = arith.constant 0 : index
    %17 = vector.load %arg7[%c0_12, %c0_13] : memref<32x32xbf16, #tpu.memory_space<vmem>>, vector<32x32xbf16>
    %cst_14 = arith.constant dense<0.000000e+00> : vector<128x32xf32>
    %18 = tpu.matmul %16, %17, %cst_14 {dimension_numbers = #tpu.dot_dimension_numbers<[1], [0], [0], [1], [0, 0, 1, 1], [], []>} : vector<128x32xbf16>, vector<32x32xbf16>, vector<128x32xf32> -> vector<128x32xf32>
    %c0_15 = arith.constant 0 : index
    %c0_16 = arith.constant 0 : index
    %19 = vector.load %arg6[%c0_15, %c0_16] : memref<128x16xbf16, #tpu.memory_space<vmem>>, vector<128x16xbf16>
    %c0_17 = arith.constant 0 : index
    %c0_18 = arith.constant 0 : index
    %20 = vector.load %arg8[%c0_17, %c0_18] : memref<16x32xbf16, #tpu.memory_space<vmem>>, vector<16x32xbf16>
    %cst_19 = arith.constant dense<0.000000e+00> : vector<128x32xf32>
    %21 = tpu.matmul %19, %20, %cst_19 {dimension_numbers = #tpu.dot_dimension_numbers<[1], [0], [0], [1], [0, 0, 1, 1], [], []>} : vector<128x16xbf16>, vector<16x32xbf16>, vector<128x32xf32> -> vector<128x32xf32>
    %22 = arith.addf %18, %21 : vector<128x32xf32>
    %c0_20 = arith.constant 0 : index
    %c0_21 = arith.constant 0 : index
    %23 = vector.load %arg9[%c0_20, %c0_21] : memref<1x32xf32, #tpu.memory_space<vmem>>, vector<1x32xf32>
    %24 = vector.broadcast %23 : vector<1x32xf32> to vector<128x32xf32>
    %25 = arith.addf %22, %24 : vector<128x32xf32>
    %cst_22 = arith.constant 0.000000e+00 : f32
    %26 = vector.broadcast %cst_22 : f32 to vector<128x32xf32>
    %27 = arith.maximumf %25, %26 : vector<128x32xf32>
    %c0_23 = arith.constant 0 : index
    %c0_24 = arith.constant 0 : index
    %28 = vector.load %arg10[%c0_23, %c0_24] : memref<1x32xbf16, #tpu.memory_space<vmem>>, vector<1x32xbf16>
    %29 = arith.truncf %27 : vector<128x32xf32> to vector<128x32xbf16>
    %cst_25 = arith.constant dense<0.000000e+00> : vector<1x128xf32>
    %30 = tpu.matmul %28, %29, %cst_25 {dimension_numbers = #tpu.dot_dimension_numbers<[1], [1], [0], [0], [0, 0, 1, 0], [], []>} : vector<1x32xbf16>, vector<128x32xbf16>, vector<1x128xf32> -> vector<1x128xf32>
    %c0_26 = arith.constant 0 : index
    %c0_27 = arith.constant 0 : index
    %31 = vector.load %arg11[%c0_26, %c0_27] : memref<1x1xf32, #tpu.memory_space<vmem>>, vector<1x1xf32>
    %32 = vector.broadcast %31 : vector<1x1xf32> to vector<1x128xf32>
    %33 = arith.addf %30, %32 : vector<1x128xf32>
    %c0_28 = arith.constant 0 : index
    %c0_29 = arith.constant 0 : index
    %34 = vector.load %arg12[%c0_28, %c0_29] : memref<1x128xf32, #tpu.memory_space<vmem>>, vector<1x128xf32>
    tpu.vector_store %arg12[%c0_28, %c0_29], %33 {strides = array<i32>} : memref<1x128xf32, #tpu.memory_space<vmem>>, vector<1x128xf32>,
    return
  }
  func.func @transform_0(%arg0: i32) -> (i32, i32) {
    %c0_i32 = arith.constant 0 : i32
    %c0_i32_0 = arith.constant 0 : i32
    return %arg0, %c0_i32 : i32, i32
  }
  func.func @transform_1(%arg0: i32) -> (i32, i32) {
    %c0_i32 = arith.constant 0 : i32
    %c0_i32_0 = arith.constant 0 : i32
    %c0_i32_1 = arith.constant 0 : i32
    return %c0_i32, %c0_i32_0 : i32, i32
  }
  func.func @transform_2(%arg0: i32) -> (i32, i32) {
    %c0_i32 = arith.constant 0 : i32
    %c0_i32_0 = arith.constant 0 : i32
    %c0_i32_1 = arith.constant 0 : i32
    return %c0_i32, %c0_i32_0 : i32, i32
  }
  func.func @transform_3(%arg0: i32) -> (i32, i32) {
    %c0_i32 = arith.constant 0 : i32
    %c0_i32_0 = arith.constant 0 : i32
    %c0_i32_1 = arith.constant 0 : i32
    return %c0_i32, %c0_i32_0 : i32, i32
  }
  func.func @transform_4(%arg0: i32) -> (i32, i32) {
    %c0_i32 = arith.constant 0 : i32
    %c0_i32_0 = arith.constant 0 : i32
    %c0_i32_1 = arith.constant 0 : i32
    return %c0_i32, %c0_i32_0 : i32, i32
  }
  func.func @transform_5(%arg0: i32) -> (i32, i32) {
    %c0_i32 = arith.constant 0 : i32
    %c0_i32_0 = arith.constant 0 : i32
    return %arg0, %c0_i32 : i32, i32
  }
  func.func @transform_6(%arg0: i32) -> (i32, i32) {
    %c0_i32 = arith.constant 0 : i32
    %c0_i32_0 = arith.constant 0 : i32
    %c0_i32_1 = arith.constant 0 : i32
    return %c0_i32, %c0_i32_0 : i32, i32
  }
  func.func @transform_7(%arg0: i32) -> (i32, i32) {
    %c0_i32 = arith.constant 0 : i32
    %c0_i32_0 = arith.constant 0 : i32
    %c0_i32_1 = arith.constant 0 : i32
    return %c0_i32, %c0_i32_0 : i32, i32
  }
  func.func @transform_8(%arg0: i32) -> (i32, i32) {
    %c0_i32 = arith.constant 0 : i32
    %c0_i32_0 = arith.constant 0 : i32
    %c0_i32_1 = arith.constant 0 : i32
    return %c0_i32, %c0_i32_0 : i32, i32
  }
  func.func @transform_9(%arg0: i32) -> (i32, i32) {
    %c0_i32 = arith.constant 0 : i32
    %c0_i32_0 = arith.constant 0 : i32
    %c0_i32_1 = arith.constant 0 : i32
    return %c0_i32, %c0_i32_0 : i32, i32
  }
  func.func @transform_10(%arg0: i32) -> (i32, i32) {
    %c0_i32 = arith.constant 0 : i32
    %c0_i32_0 = arith.constant 0 : i32
    %c0_i32_1 = arith.constant 0 : i32
    return %c0_i32, %c0_i32_0 : i32, i32
  }
  func.func @transform_11(%arg0: i32) -> (i32, i32) {
    %c0_i32 = arith.constant 0 : i32
    %c0_i32_0 = arith.constant 0 : i32
    return %arg0, %c0_i32 : i32, i32
  }
}

</mosaic_0001>

<llo_original>
// kernel: tpu_custom_call.1
$region0: #{tpu_custom_call.1}
  #allocation0 [shape = 'u32[]', space=smem, size = 0x4, offset = 0x4, fixed_abs, tag = 'smem constant byte address 0x4 - core index']
  #allocation1 [shape = 'u32[144,128]{1,0:T(1,128)}', space=vmem, size = 0x12000, scoped, tag = 'internal scratch']
  #allocation2 [shape = 'f32[1,1]{1,0:T(1,128)S(1)}', space=vmem, size = 0x200, scoped, tag = 'scoped memory for tpu_custom_call.1']
  %s0 = inlined_call_operand.vmem [shape: bf16[128,64], index: 0, kind: input, shape index: {}]
  %s1 = inlined_call_operand.vmem [shape: bf16[64,32], index: 1, kind: input, shape index: {}]
  %s2 = inlined_call_operand.vmem [shape: f32[1,32], index: 2, kind: input, shape index: {}]
  %s3 = inlined_call_operand.vmem [shape: bf16[32,32], index: 3, kind: input, shape index: {}]
  %s4 = inlined_call_operand.vmem [shape: f32[1,32], index: 4, kind: input, shape index: {}]
  %s5 = inlined_call_operand.vmem [shape: bf16[128,16], index: 5, kind: input, shape index: {}]
  %s6 = inlined_call_operand.vmem [shape: bf16[32,32], index: 6, kind: input, shape index: {}]
  %s7 = inlined_call_operand.vmem [shape: bf16[16,32], index: 7, kind: input, shape index: {}]
  %s8 = inlined_call_operand.vmem [shape: f32[1,32], index: 8, kind: input, shape index: {}]
  %s9 = inlined_call_operand.vmem [shape: bf16[1,32], index: 9, kind: input, shape index: {}]
  %s10 = inlined_call_operand.<no memory space> [shape: f32[1,1], index: 10, kind: input, shape index: {}]
  %s11 = inlined_call_operand.hbm [shape: f32[1,128], index: 11, kind: output, shape index: {}]
  %s12 = sld [smem:[#allocation0]]
  $region54: #{tpu_custom_call.1} parent=0
    _
  %s14 = ssub.s32 1, %s12
  %s15 = scalar_select 0, %s14, %s12
  %v16 = vstv %s10
  %17 = vst [vmem:[#allocation2] sm:$0x1] %v16
  $region1: #{tpu_custom_call.1} parent=0
    #allocation3 [shape = 'u8[512]{0}', space=vmem, size = 0x400, scoped, tag = 'output window, operand 0, single buffered']
    #allocation4 [shape = 's32[1]{0}', space=sflag, size = 0x4, scoped, tag = 'scoped memory for tpu_custom_call.1']
    %18 = vsyncpa [#allocation4], 0
    // Predicated region
    $region2: #{tpu_custom_call.1} parent=1 // pred_check
      _
    $region3: #{tpu_custom_call.1} parent=1 // pred_check_branch
      %20 = sbr.rel (0) target = $region5
    $region4: #{tpu_custom_call.1} parent=1 // pred_region
      _
    $region5: #{tpu_custom_call.1} parent=1 // pred_fallthru
      _
    // Predicated region
    $region6: #{tpu_custom_call.1} parent=1 // pred_check
      _
    $region7: #{tpu_custom_call.1} parent=1 // pred_check_branch
      %22 = sbr.rel (0) target = $region9
    $region8: #{tpu_custom_call.1} parent=1 // pred_region
      _
    $region9: #{tpu_custom_call.1} parent=1 // pred_fallthru
      _
    // Predicated region
    $region10: #{tpu_custom_call.1} parent=1 // pred_check
      _
    $region11: #{tpu_custom_call.1} parent=1 // pred_check_branch
      %24 = sbr.rel (0) target = $region13
    $region12: #{tpu_custom_call.1} parent=1 // pred_region
      _
    $region13: #{tpu_custom_call.1} parent=1 // pred_fallthru
      _
    // Predicated region
    $region14: #{tpu_custom_call.1} parent=1 // pred_check
      _
    $region15: #{tpu_custom_call.1} parent=1 // pred_check_branch
      %26 = sbr.rel (0) target = $region17
    $region16: #{tpu_custom_call.1} parent=1 // pred_region
      _
    $region17: #{tpu_custom_call.1} parent=1 // pred_fallthru
      _
    // Predicated region
    $region18: #{tpu_custom_call.1} parent=1 // pred_check
      _
    $region19: #{tpu_custom_call.1} parent=1 // pred_check_branch
      %28 = sbr.rel (0) target = $region21
    $region20: #{tpu_custom_call.1} parent=1 // pred_region
      _
    $region21: #{tpu_custom_call.1} parent=1 // pred_fallthru
      _
    // Predicated region
    $region22: #{tpu_custom_call.1} parent=1 // pred_check
      _
    $region23: #{tpu_custom_call.1} parent=1 // pred_check_branch
      %30 = sbr.rel (0) target = $region25
    $region24: #{tpu_custom_call.1} parent=1 // pred_region
      _
    $region25: #{tpu_custom_call.1} parent=1 // pred_fallthru
      _
    // Predicated region
    $region26: #{tpu_custom_call.1} parent=1 // pred_check
      _
    $region27: #{tpu_custom_call.1} parent=1 // pred_check_branch
      %32 = sbr.rel (0) target = $region29
    $region28: #{tpu_custom_call.1} parent=1 // pred_region
      _
    $region29: #{tpu_custom_call.1} parent=1 // pred_fallthru
      _
    // Predicated region
    $region30: #{tpu_custom_call.1} parent=1 // pred_check
      _
    $region31: #{tpu_custom_call.1} parent=1 // pred_check_branch
      %34 = sbr.rel (0) target = $region33
    $region32: #{tpu_custom_call.1} parent=1 // pred_region
      _
    $region33: #{tpu_custom_call.1} parent=1 // pred_fallthru
      _
    // Predicated region
    $region34: #{tpu_custom_call.1} parent=1 // pred_check
      _
    $region35: #{tpu_custom_call.1} parent=1 // pred_check_branch
      %36 = sbr.rel (0) target = $region37
    $region36: #{tpu_custom_call.1} parent=1 // pred_region
      _
    $region37: #{tpu_custom_call.1} parent=1 // pred_fallthru
      _
    // Predicated region
    $region38: #{tpu_custom_call.1} parent=1 // pred_check
      _
    $region39: #{tpu_custom_call.1} parent=1 // pred_check_branch
      %38 = sbr.rel (0) target = $region41
    $region40: #{tpu_custom_call.1} parent=1 // pred_region
      _
    $region41: #{tpu_custom_call.1} parent=1 // pred_fallthru
      _
    // Predicated region
    $region42: #{tpu_custom_call.1} parent=1 // pred_check
      _
    $region43: #{tpu_custom_call.1} parent=1 // pred_check_branch
      %40 = sbr.rel (0) target = $region45
    $region44: #{tpu_custom_call.1} parent=1 // pred_region
      _
    $region45: #{tpu_custom_call.1} parent=1 // pred_fallthru
      _
    %v42 = vld [vmem:[%s0] sm:$0xf]
    %v43 = vld [vmem:[%s0 + $0x4] sm:$0xf]
    %v44 = vld [vmem:[%s0 + $0x8] sm:$0xf]
    %v45 = vld [vmem:[%s0 + $0xc] sm:$0xf]
    %v46 = vld [vmem:[%s0 + $0x10] sm:$0xf]
    %v47 = vld [vmem:[%s0 + $0x14] sm:$0xf]
    %v48 = vld [vmem:[%s0 + $0x18] sm:$0xf]
    %v49 = vld [vmem:[%s0 + $0x1c] sm:$0xf]
    %v50 = vld [vmem:[%s0 + $0x20] sm:$0xf]
    %v51 = vld [vmem:[%s0 + $0x24] sm:$0xf]
    %v52 = vld [vmem:[%s0 + $0x28] sm:$0xf]
    %v53 = vld [vmem:[%s0 + $0x2c] sm:$0xf]
    %v54 = vld [vmem:[%s0 + $0x30] sm:$0xf]
    %v55 = vld [vmem:[%s0 + $0x34] sm:$0xf]
    %v56 = vld [vmem:[%s0 + $0x38] sm:$0xf]
    %v57 = vld [vmem:[%s0 + $0x3c] sm:$0xf]
    %v58 = vld [vmem:[%s1] sm:$0xf]
    %v59 = vld [vmem:[%s1 + $0x4] sm:$0xf]
    %v60 = vld [vmem:[%s1 + $0x8] sm:$0xf]
    %v61 = vld [vmem:[%s1 + $0xc] sm:$0xf]
    %v62 = vld [vmem:[%s1 + $0x10] sm:$0xf]
    %v63 = vld [vmem:[%s1 + $0x14] sm:$0xf]
    %v64 = vld [vmem:[%s1 + $0x18] sm:$0xf]
    %v65 = vld [vmem:[%s1 + $0x1c] sm:$0xf]
    %v66 = vld [vmem:[%s2] sm:$0x1]
    %v68 = vlaneseq
    %v69 = vshrl.u32 %v68, 7
    %v70 = vsub.s32 0, %v69
    %v71 = vrot.slane %v66, %v70
    %v89 = vunpack.c.l.b16 %v42
    %v90 = vunpack.c.l.b16 %v43
    %v91 = vunpack.c.l.b16 %v44
    %v92 = vunpack.c.l.b16 %v45
    %v93 = vunpack.c.l.b16 %v46
    %v94 = vunpack.c.l.b16 %v47
    %v95 = vunpack.c.l.b16 %v48
    %v96 = vunpack.c.l.b16 %v49
    %v97 = vunpack.c.l.b16 %v50
    %v98 = vunpack.c.l.b16 %v51
    %v99 = vunpack.c.l.b16 %v52
    %v100 = vunpack.c.l.b16 %v53
    %v101 = vunpack.c.l.b16 %v54
    %v102 = vunpack.c.l.b16 %v55
    %v103 = vunpack.c.l.b16 %v56
    %v104 = vunpack.c.l.b16 %v57
    %v105 = vpack.c.b16 %v90, %v89
    %v106 = vpack.c.b16 %v92, %v91
    %v107 = vpack.c.b16 %v94, %v93
    %v108 = vpack.c.b16 %v96, %v95
    %v109 = vpack.c.b16 %v98, %v97
    %v110 = vpack.c.b16 %v100, %v99
    %v111 = vpack.c.b16 %v102, %v101
    %v112 = vpack.c.b16 %v104, %v103
    %v121 = vunpack.c.l.b16 %v58
    %v122 = vunpack.c.l.b16 %v59
    %v123 = vunpack.c.l.b16 %v60
    %v124 = vunpack.c.l.b16 %v61
    %v125 = vunpack.c.l.b16 %v62
    %v126 = vunpack.c.l.b16 %v63
    %v127 = vunpack.c.l.b16 %v64
    %v128 = vunpack.c.l.b16 %v65
    %v129 = vpack.c.b16 %v122, %v121
    %v130 = vpack.c.b16 %v124, %v123
    %v131 = vpack.c.b16 %v126, %v125
    %v132 = vpack.c.b16 %v128, %v127
    %vm137 = vcmask 523264
    %v139 = vsel %vm137, %v105, 0
    %v142 = vsel %vm137, %v106, 0
    %v145 = vsel %vm137, %v107, 0
    %v148 = vsel %vm137, %v108, 0
    %v151 = vsel %vm137, %v109, 0
    %v154 = vsel %vm137, %v110, 0
    %v157 = vsel %vm137, %v111, 0
    %v160 = vsel %vm137, %v112, 0
    %162 = vmatprep.subr.bf16.mxu0 0
    %163 = vmatpush1.bf16.msra.mxu0 %v129
    %164 = vmatprep.subr.bf16.mxu0 0
    %165 = vmatpush1.bf16.msra.mxu0 %v130
    %166 = vmatprep.subr.bf16.mxu0 0
    %167 = vmatpush1.bf16.msra.mxu0 %v131
    %168 = vmatprep.subr.bf16.mxu0 0
    %169 = vmatpush1.bf16.msra.mxu0 %v132
    %170 = vmatprep.subr.bf16.mxu0 0
    %171 = vmatpush1.bf16.msra.mxu0 0
    %172 = vmatprep.subr.bf16.mxu0 0
    %173 = vmatpush1.bf16.msra.mxu0 0
    %174 = vmatprep.subr.bf16.mxu0 0
    %175 = vmatpush1.bf16.msra.mxu0 0
    %176 = vmatprep.subr.bf16.mxu0 0
    %177 = vmatpush1.bf16.msra.mxu0 0
    %178 = vmatprep.subr.bf16.mxu0 0
    %179 = vmatpush1.bf16.msra.mxu0 0
    %180 = vmatprep.subr.bf16.mxu0 0
    %181 = vmatpush1.bf16.msra.mxu0 0
    %182 = vmatprep.subr.bf16.mxu0 0
    %183 = vmatpush1.bf16.msra.mxu0 0
    %184 = vmatprep.subr.bf16.mxu0 0
    %185 = vmatpush1.bf16.msra.mxu0 0
    %186 = vmatprep.subr.bf16.mxu0 0
    %187 = vmatpush1.bf16.msra.mxu0 0
    %188 = vmatprep.subr.bf16.mxu0 0
    %189 = vmatpush1.bf16.msra.mxu0 0
    %190 = vmatprep.subr.bf16.mxu0 0
    %191 = vmatpush1.bf16.msra.mxu0 0
    %192 = vmatprep.subr.bf16.mxu0 0
    %193 = vmatpush1.bf16.msra.mxu0 0
    %194 = vmatprep.mubr.bf16.mxu0 0
    %195 = vmatmul.mubr.bf16.gmra.mrb[0].mxu0 %v139
    %v196 = vpop.f32.mrb[0].mxu0
    %v197 = vadd.f32 %v71, %v196
    %v198 = vpop.f32.mrb[0].mxu0
    %v199 = vpop.f32.mrb[0].mxu0
    %v200 = vadd.f32 %v71, %v199
    %v201 = vpop.f32.mrb[0].mxu0
    %202 = vmatprep.mubr.bf16.mxu0 0
    %203 = vmatmul.mubr.bf16.gmra.mrb[0].mxu0 %v142
    %v204 = vpop.f32.mrb[0].mxu0
    %v205 = vadd.f32 %v71, %v204
    %v206 = vpop.f32.mrb[0].mxu0
    %v207 = vpop.f32.mrb[0].mxu0
    %v208 = vadd.f32 %v71, %v207
    %v209 = vpop.f32.mrb[0].mxu0
    %210 = vmatprep.mubr.bf16.mxu0 0
    %211 = vmatmul.mubr.bf16.gmra.mrb[0].mxu0 %v145
    %v212 = vpop.f32.mrb[0].mxu0
    %v213 = vadd.f32 %v71, %v212
    %v214 = vpop.f32.mrb[0].mxu0
    %v215 = vpop.f32.mrb[0].mxu0
    %v216 = vadd.f32 %v71, %v215
    %v217 = vpop.f32.mrb[0].mxu0
    %218 = vmatprep.mubr.bf16.mxu0 0
    %219 = vmatmul.mubr.bf16.gmra.mrb[0].mxu0 %v148
    %v220 = vpop.f32.mrb[0].mxu0
    %v221 = vadd.f32 %v71, %v220
    %v222 = vpop.f32.mrb[0].mxu0
    %v223 = vpop.f32.mrb[0].mxu0
    %v224 = vadd.f32 %v71, %v223
    %v225 = vpop.f32.mrb[0].mxu0
    %226 = vmatprep.mubr.bf16.mxu0 0
    %227 = vmatmul.mubr.bf16.gmra.mrb[0].mxu0 %v151
    %v228 = vpop.f32.mrb[0].mxu0
    %v229 = vadd.f32 %v71, %v228
    %v230 = vpop.f32.mrb[0].mxu0
    %v231 = vpop.f32.mrb[0].mxu0
    %v232 = vadd.f32 %v71, %v231
    %v233 = vpop.f32.mrb[0].mxu0
    %234 = vmatprep.mubr.bf16.mxu0 0
    %235 = vmatmul.mubr.bf16.gmra.mrb[0].mxu0 %v154
    %v236 = vpop.f32.mrb[0].mxu0
    %v237 = vadd.f32 %v71, %v236
    %v238 = vpop.f32.mrb[0].mxu0
    %v239 = vpop.f32.mrb[0].mxu0
    %v240 = vadd.f32 %v71, %v239
    %v241 = vpop.f32.mrb[0].mxu0
    %242 = vmatprep.mubr.bf16.mxu0 0
    %243 = vmatmul.mubr.bf16.gmra.mrb[0].mxu0 %v157
    %v244 = vpop.f32.mrb[0].mxu0
    %v245 = vadd.f32 %v71, %v244
    %v246 = vpop.f32.mrb[0].mxu0
    %v247 = vpop.f32.mrb[0].mxu0
    %v248 = vadd.f32 %v71, %v247
    %v249 = vpop.f32.mrb[0].mxu0
    %250 = vmatprep.mubr.bf16.mxu0 0
    %251 = vmatmul.mubr.bf16.gmra.mrb[0].mxu0 %v160
    %v252 = vpop.f32.mrb[0].mxu0
    %v253 = vadd.f32 %v71, %v252
    %v254 = vpop.f32.mrb[0].mxu0
    %v255 = vpop.f32.mrb[0].mxu0
    %v256 = vadd.f32 %v71, %v255
    %v257 = vpop.f32.mrb[0].mxu0
    %258 = vdwg.mxu0
    %v259 = vmax.f32 %v197, 0.0
    %v260 = vmax.f32 %v200, 0.0
    %v261 = vmax.f32 %v205, 0.0
    %v262 = vmax.f32 %v208, 0.0
    %v263 = vmax.f32 %v213, 0.0
    %v264 = vmax.f32 %v216, 0.0
    %v265 = vmax.f32 %v221, 0.0
    %v266 = vmax.f32 %v224, 0.0
    %v267 = vmax.f32 %v229, 0.0
    %v268 = vmax.f32 %v232, 0.0
    %v269 = vmax.f32 %v237, 0.0
    %v270 = vmax.f32 %v240, 0.0
    %v271 = vmax.f32 %v245, 0.0
    %v272 = vmax.f32 %v248, 0.0
    %v273 = vmax.f32 %v253, 0.0
    %v274 = vmax.f32 %v256, 0.0
    %v275 = vpack.c.bf16 %v260, %v259
    %v276 = vpack.c.bf16 %v262, %v261
    %v277 = vpack.c.bf16 %v264, %v263
    %v278 = vpack.c.bf16 %v266, %v265
    %v279 = vpack.c.bf16 %v268, %v267
    %v280 = vpack.c.bf16 %v270, %v269
    %v281 = vpack.c.bf16 %v272, %v271
    %v282 = vpack.c.bf16 %v274, %v273
    %v283 = vld [vmem:[%s3] sm:$0xf]
    %v284 = vld [vmem:[%s3 + $0x4] sm:$0xf]
    %v285 = vld [vmem:[%s3 + $0x8] sm:$0xf]
    %v286 = vld [vmem:[%s3 + $0xc] sm:$0xf]
    %v287 = vld [vmem:[%s4] sm:$0x1]
    %v289 = vlaneseq
    %v290 = vshrl.u32 %v289, 7
    %v291 = vsub.s32 0, %v290
    %v292 = vrot.slane %v287, %v291
    %v298 = vunpack.c.l.b16 %v283
    %v299 = vunpack.c.l.b16 %v284
    %v300 = vunpack.c.l.b16 %v285
    %v301 = vunpack.c.l.b16 %v286
    %v302 = vpack.c.b16 %v299, %v298
    %v303 = vpack.c.b16 %v301, %v300
    %vm306 = vcmask 261120
    %v308 = vsel %vm306, %v275, 0
    %v311 = vsel %vm306, %v276, 0
    %v314 = vsel %vm306, %v277, 0
    %v317 = vsel %vm306, %v278, 0
    %v320 = vsel %vm306, %v279, 0
    %v323 = vsel %vm306, %v280, 0
    %v326 = vsel %vm306, %v281, 0
    %v329 = vsel %vm306, %v282, 0
    %331 = vmatprep.subr.bf16.mxu0 0
    %332 = vmatpush1.bf16.msra.mxu0 %v302
    %333 = vmatprep.subr.bf16.mxu0 0
    %334 = vmatpush1.bf16.msra.mxu0 %v303
    %335 = vmatprep.subr.bf16.mxu0 0
    %336 = vmatpush1.bf16.msra.mxu0 0
    %337 = vmatprep.subr.bf16.mxu0 0
    %338 = vmatpush1.bf16.msra.mxu0 0
    %339 = vmatprep.subr.bf16.mxu0 0
    %340 = vmatpush1.bf16.msra.mxu0 0
    %341 = vmatprep.subr.bf16.mxu0 0
    %342 = vmatpush1.bf16.msra.mxu0 0
    %343 = vmatprep.subr.bf16.mxu0 0
    %344 = vmatpush1.bf16.msra.mxu0 0
    %345 = vmatprep.subr.bf16.mxu0 0
    %346 = vmatpush1.bf16.msra.mxu0 0
    %347 = vmatprep.subr.bf16.mxu0 0
    %348 = vmatpush1.bf16.msra.mxu0 0
    %349 = vmatprep.subr.bf16.mxu0 0
    %350 = vmatpush1.bf16.msra.mxu0 0
    %351 = vmatprep.subr.bf16.mxu0 0
    %352 = vmatpush1.bf16.msra.mxu0 0
    %353 = vmatprep.subr.bf16.mxu0 0
    %354 = vmatpush1.bf16.msra.mxu0 0
    %355 = vmatprep.subr.bf16.mxu0 0
    %356 = vmatpush1.bf16.msra.mxu0 0
    %357 = vmatprep.subr.bf16.mxu0 0
    %358 = vmatpush1.bf16.msra.mxu0 0
    %359 = vmatprep.subr.bf16.mxu0 0
    %360 = vmatpush1.bf16.msra.mxu0 0
    %361 = vmatprep.subr.bf16.mxu0 0
    %362 = vmatpush1.bf16.msra.mxu0 0
    %363 = vmatprep.mubr.bf16.mxu0 0
    %364 = vmatmul.mubr.bf16.gmra.mrb[0].mxu0 %v308
    %v365 = vpop.f32.mrb[0].mxu0
    %v366 = vadd.f32 %v292, %v365
    %v367 = vpop.f32.mrb[0].mxu0
    %v368 = vpop.f32.mrb[0].mxu0
    %v369 = vadd.f32 %v292, %v368
    %v370 = vpop.f32.mrb[0].mxu0
    %371 = vmatprep.mubr.bf16.mxu0 0
    %372 = vmatmul.mubr.bf16.gmra.mrb[0].mxu0 %v311
    %v373 = vpop.f32.mrb[0].mxu0
    %v374 = vadd.f32 %v292, %v373
    %v375 = vpop.f32.mrb[0].mxu0
    %v376 = vpop.f32.mrb[0].mxu0
    %v377 = vadd.f32 %v292, %v376
    %v378 = vpop.f32.mrb[0].mxu0
    %379 = vmatprep.mubr.bf16.mxu0 0
    %380 = vmatmul.mubr.bf16.gmra.mrb[0].mxu0 %v314
    %v381 = vpop.f32.mrb[0].mxu0
    %v382 = vadd.f32 %v292, %v381
    %v383 = vpop.f32.mrb[0].mxu0
    %v384 = vpop.f32.mrb[0].mxu0
    %v385 = vadd.f32 %v292, %v384
    %v386 = vpop.f32.mrb[0].mxu0
    %387 = vmatprep.mubr.bf16.mxu0 0
    %388 = vmatmul.mubr.bf16.gmra.mrb[0].mxu0 %v317
    %v389 = vpop.f32.mrb[0].mxu0
    %v390 = vadd.f32 %v292, %v389
    %v391 = vpop.f32.mrb[0].mxu0
    %v392 = vpop.f32.mrb[0].mxu0
    %v393 = vadd.f32 %v292, %v392
    %v394 = vpop.f32.mrb[0].mxu0
    %395 = vmatprep.mubr.bf16.mxu0 0
    %396 = vmatmul.mubr.bf16.gmra.mrb[0].mxu0 %v320
    %v397 = vpop.f32.mrb[0].mxu0
    %v398 = vadd.f32 %v292, %v397
    %v399 = vpop.f32.mrb[0].mxu0
    %v400 = vpop.f32.mrb[0].mxu0
    %v401 = vadd.f32 %v292, %v400
    %v402 = vpop.f32.mrb[0].mxu0
    %403 = vmatprep.mubr.bf16.mxu0 0
    %404 = vmatmul.mubr.bf16.gmra.mrb[0].mxu0 %v323
    %v405 = vpop.f32.mrb[0].mxu0
    %v406 = vadd.f32 %v292, %v405
    %v407 = vpop.f32.mrb[0].mxu0
    %v408 = vpop.f32.mrb[0].mxu0
    %v409 = vadd.f32 %v292, %v408
    %v410 = vpop.f32.mrb[0].mxu0
    %411 = vmatprep.mubr.bf16.mxu0 0
    %412 = vmatmul.mubr.bf16.gmra.mrb[0].mxu0 %v326
    %v413 = vpop.f32.mrb[0].mxu0
    %v414 = vadd.f32 %v292, %v413
    %v415 = vpop.f32.mrb[0].mxu0
    %v416 = vpop.f32.mrb[0].mxu0
    %v417 = vadd.f32 %v292, %v416
    %v418 = vpop.f32.mrb[0].mxu0
    %419 = vmatprep.mubr.bf16.mxu0 0
    %420 = vmatmul.mubr.bf16.gmra.mrb[0].mxu0 %v329
    %v421 = vpop.f32.mrb[0].mxu0
    %v422 = vadd.f32 %v292, %v421
    %v423 = vpop.f32.mrb[0].mxu0
    %v424 = vpop.f32.mrb[0].mxu0
    %v425 = vadd.f32 %v292, %v424
    %v426 = vpop.f32.mrb[0].mxu0
    %427 = vdwg.mxu0
    %v428 = vmax.f32 %v366, 0.0
    %v429 = vmax.f32 %v369, 0.0
    %v430 = vmax.f32 %v374, 0.0
    %v431 = vmax.f32 %v377, 0.0
    %v432 = vmax.f32 %v382, 0.0
    %v433 = vmax.f32 %v385, 0.0
    %v434 = vmax.f32 %v390, 0.0
    %v435 = vmax.f32 %v393, 0.0
    %v436 = vmax.f32 %v398, 0.0
    %v437 = vmax.f32 %v401, 0.0
    %v438 = vmax.f32 %v406, 0.0
    %v439 = vmax.f32 %v409, 0.0
    %v440 = vmax.f32 %v414, 0.0
    %v441 = vmax.f32 %v417, 0.0
    %v442 = vmax.f32 %v422, 0.0
    %v443 = vmax.f32 %v425, 0.0
    %v444 = vpack.c.bf16 %v429, %v428
    %v445 = vpack.c.bf16 %v431, %v430
    %v446 = vpack.c.bf16 %v433, %v432
    %v447 = vpack.c.bf16 %v435, %v434
    %v448 = vpack.c.bf16 %v437, %v436
    %v449 = vpack.c.bf16 %v439, %v438
    %v450 = vpack.c.bf16 %v441, %v440
    %v451 = vpack.c.bf16 %v443, %v442
    %v452 = vld [vmem:[%s6] sm:$0xf]
    %v453 = vld [vmem:[%s6 + $0x4] sm:$0xf]
    %v454 = vld [vmem:[%s6 + $0x8] sm:$0xf]
    %v455 = vld [vmem:[%s6 + $0xc] sm:$0xf]
    %v456 = vld [vmem:[%s5] sm:$0xf]
    %v457 = vld [vmem:[%s5 + $0x4] sm:$0xf]
    %v458 = vld [vmem:[%s5 + $0x8] sm:$0xf]
    %v459 = vld [vmem:[%s5 + $0xc] sm:$0xf]
    %v460 = vld [vmem:[%s5 + $0x10] sm:$0xf]
    %v461 = vld [vmem:[%s5 + $0x14] sm:$0xf]
    %v462 = vld [vmem:[%s5 + $0x18] sm:$0xf]
    %v463 = vld [vmem:[%s5 + $0x1c] sm:$0xf]
    %v464 = vld [vmem:[%s5 + $0x20] sm:$0xf]
    %v465 = vld [vmem:[%s5 + $0x24] sm:$0xf]
    %v466 = vld [vmem:[%s5 + $0x28] sm:$0xf]
    %v467 = vld [vmem:[%s5 + $0x2c] sm:$0xf]
    %v468 = vld [vmem:[%s5 + $0x30] sm:$0xf]
    %v469 = vld [vmem:[%s5 + $0x34] sm:$0xf]
    %v470 = vld [vmem:[%s5 + $0x38] sm:$0xf]
    %v471 = vld [vmem:[%s5 + $0x3c] sm:$0xf]
    %v472 = vld [vmem:[%s7] sm:$0xf]
    %v473 = vld [vmem:[%s7 + $0x4] sm:$0xf]
    %v490 = vunpack.c.l.b16 %v456
    %v491 = vunpack.c.l.b16 %v457
    %v492 = vunpack.c.l.b16 %v458
    %v493 = vunpack.c.l.b16 %v459
    %v494 = vunpack.c.l.b16 %v460
    %v495 = vunpack.c.l.b16 %v461
    %v496 = vunpack.c.l.b16 %v462
    %v497 = vunpack.c.l.b16 %v463
    %v498 = vunpack.c.l.b16 %v464
    %v499 = vunpack.c.l.b16 %v465
    %v500 = vunpack.c.l.b16 %v466
    %v501 = vunpack.c.l.b16 %v467
    %v502 = vunpack.c.l.b16 %v468
    %v503 = vunpack.c.l.b16 %v469
    %v504 = vunpack.c.l.b16 %v470
    %v505 = vunpack.c.l.b16 %v471
    %v506 = vpack.c.b16 %v491, %v490
    %v507 = vpack.c.b16 %v493, %v492
    %v508 = vpack.c.b16 %v495, %v494
    %v509 = vpack.c.b16 %v497, %v496
    %v510 = vpack.c.b16 %v499, %v498
    %v511 = vpack.c.b16 %v501, %v500
    %v512 = vpack.c.b16 %v503, %v502
    %v513 = vpack.c.b16 %v505, %v504
    %v516 = vunpack.c.l.b16 %v472
    %v517 = vunpack.c.l.b16 %v473
    %v518 = vpack.c.b16 %v517, %v516
    %vm520 = vcmask 130048
    %v522 = vsel %vm520, %v506, 0
    %v525 = vsel %vm520, %v507, 0
    %v528 = vsel %vm520, %v508, 0
    %v531 = vsel %vm520, %v509, 0
    %v534 = vsel %vm520, %v510, 0
    %v537 = vsel %vm520, %v511, 0
    %v540 = vsel %vm520, %v512, 0
    %v543 = vsel %vm520, %v513, 0
    %545 = vmatprep.subr.bf16.mxu0 0
    %546 = vmatpush1.bf16.msra.mxu0 %v518
    %547 = vmatprep.subr.bf16.mxu0 0
    %548 = vmatpush1.bf16.msra.mxu0 0
    %549 = vmatprep.subr.bf16.mxu0 0
    %550 = vmatpush1.bf16.msra.mxu0 0
    %551 = vmatprep.subr.bf16.mxu0 0
    %552 = vmatpush1.bf16.msra.mxu0 0
    %553 = vmatprep.subr.bf16.mxu0 0
    %554 = vmatpush1.bf16.msra.mxu0 0
    %555 = vmatprep.subr.bf16.mxu0 0
    %556 = vmatpush1.bf16.msra.mxu0 0
    %557 = vmatprep.subr.bf16.mxu0 0
    %558 = vmatpush1.bf16.msra.mxu0 0
    %559 = vmatprep.subr.bf16.mxu0 0
    %560 = vmatpush1.bf16.msra.mxu0 0
    %561 = vmatprep.subr.bf16.mxu0 0
    %562 = vmatpush1.bf16.msra.mxu0 0
    %563 = vmatprep.subr.bf16.mxu0 0
    %564 = vmatpush1.bf16.msra.mxu0 0
    %565 = vmatprep.subr.bf16.mxu0 0
    %566 = vmatpush1.bf16.msra.mxu0 0
    %567 = vmatprep.subr.bf16.mxu0 0
    %568 = vmatpush1.bf16.msra.mxu0 0
    %569 = vmatprep.subr.bf16.mxu0 0
    %570 = vmatpush1.bf16.msra.mxu0 0
    %571 = vmatprep.subr.bf16.mxu0 0
    %572 = vmatpush1.bf16.msra.mxu0 0
    %573 = vmatprep.subr.bf16.mxu0 0
    %574 = vmatpush1.bf16.msra.mxu0 0
    %575 = vmatprep.subr.bf16.mxu0 0
    %576 = vmatpush1.bf16.msra.mxu0 0
    %577 = vmatprep.mubr.bf16.mxu0 0
    %578 = vmatmul.mubr.bf16.gmra.mrb[0].mxu0 %v522
    %v579 = vpop.f32.mrb[0].mxu0
    %v580 = vadd.f32 0.0, %v579
    %v581 = vpop.f32.mrb[0].mxu0
    %v582 = vpop.f32.mrb[0].mxu0
    %v583 = vadd.f32 0.0, %v582
    %v584 = vpop.f32.mrb[0].mxu0
    %585 = vmatprep.mubr.bf16.mxu0 0
    %586 = vmatmul.mubr.bf16.gmra.mrb[0].mxu0 %v525
    %v587 = vpop.f32.mrb[0].mxu0
    %v588 = vadd.f32 0.0, %v587
    %v589 = vpop.f32.mrb[0].mxu0
    %v590 = vpop.f32.mrb[0].mxu0
    %v591 = vadd.f32 0.0, %v590
    %v592 = vpop.f32.mrb[0].mxu0
    %593 = vmatprep.mubr.bf16.mxu0 0
    %594 = vmatmul.mubr.bf16.gmra.mrb[0].mxu0 %v528
    %v595 = vpop.f32.mrb[0].mxu0
    %v596 = vadd.f32 0.0, %v595
    %v597 = vpop.f32.mrb[0].mxu0
    %v598 = vpop.f32.mrb[0].mxu0
    %v599 = vadd.f32 0.0, %v598
    %v600 = vpop.f32.mrb[0].mxu0
    %601 = vmatprep.mubr.bf16.mxu0 0
    %602 = vmatmul.mubr.bf16.gmra.mrb[0].mxu0 %v531
    %v603 = vpop.f32.mrb[0].mxu0
    %v604 = vadd.f32 0.0, %v603
    %v605 = vpop.f32.mrb[0].mxu0
    %v606 = vpop.f32.mrb[0].mxu0
    %v607 = vadd.f32 0.0, %v606
    %v608 = vpop.f32.mrb[0].mxu0
    %609 = vmatprep.mubr.bf16.mxu0 0
    %610 = vmatmul.mubr.bf16.gmra.mrb[0].mxu0 %v534
    %v611 = vpop.f32.mrb[0].mxu0
    %v612 = vadd.f32 0.0, %v611
    %v613 = vpop.f32.mrb[0].mxu0
    %v614 = vpop.f32.mrb[0].mxu0
    %v615 = vadd.f32 0.0, %v614
    %v616 = vpop.f32.mrb[0].mxu0
    %617 = vmatprep.mubr.bf16.mxu0 0
    %618 = vmatmul.mubr.bf16.gmra.mrb[0].mxu0 %v537
    %v619 = vpop.f32.mrb[0].mxu0
    %v620 = vadd.f32 0.0, %v619
    %v621 = vpop.f32.mrb[0].mxu0
    %v622 = vpop.f32.mrb[0].mxu0
    %v623 = vadd.f32 0.0, %v622
    %v624 = vpop.f32.mrb[0].mxu0
    %625 = vmatprep.mubr.bf16.mxu0 0
    %626 = vmatmul.mubr.bf16.gmra.mrb[0].mxu0 %v540
    %v627 = vpop.f32.mrb[0].mxu0
    %v628 = vadd.f32 0.0, %v627
    %v629 = vpop.f32.mrb[0].mxu0
    %v630 = vpop.f32.mrb[0].mxu0
    %v631 = vadd.f32 0.0, %v630
    %v632 = vpop.f32.mrb[0].mxu0
    %633 = vmatprep.mubr.bf16.mxu0 0
    %634 = vmatmul.mubr.bf16.gmra.mrb[0].mxu0 %v543
    %v635 = vpop.f32.mrb[0].mxu0
    %v636 = vadd.f32 0.0, %v635
    %v637 = vpop.f32.mrb[0].mxu0
    %v638 = vpop.f32.mrb[0].mxu0
    %v639 = vadd.f32 0.0, %v638
    %v640 = vpop.f32.mrb[0].mxu0
    %641 = vdwg.mxu0
    %v646 = vunpack.c.l.b16 %v452
    %v647 = vunpack.c.l.b16 %v453
    %v648 = vunpack.c.l.b16 %v454
    %v649 = vunpack.c.l.b16 %v455
    %v650 = vpack.c.b16 %v647, %v646
    %v651 = vpack.c.b16 %v649, %v648
    %v655 = vsel %vm306, %v444, 0
    %v658 = vsel %vm306, %v445, 0
    %v661 = vsel %vm306, %v446, 0
    %v664 = vsel %vm306, %v447, 0
    %v667 = vsel %vm306, %v448, 0
    %v670 = vsel %vm306, %v449, 0
    %v673 = vsel %vm306, %v450, 0
    %v676 = vsel %vm306, %v451, 0
    %678 = vmatprep.subr.bf16.mxu0 0
    %679 = vmatpush1.bf16.msra.mxu0 %v650
    %680 = vmatprep.subr.bf16.mxu0 0
    %681 = vmatpush1.bf16.msra.mxu0 %v651
    %682 = vmatprep.subr.bf16.mxu0 0
    %683 = vmatpush1.bf16.msra.mxu0 0
    %684 = vmatprep.subr.bf16.mxu0 0
    %685 = vmatpush1.bf16.msra.mxu0 0
    %686 = vmatprep.subr.bf16.mxu0 0
    %687 = vmatpush1.bf16.msra.mxu0 0
    %688 = vmatprep.subr.bf16.mxu0 0
    %689 = vmatpush1.bf16.msra.mxu0 0
    %690 = vmatprep.subr.bf16.mxu0 0
    %691 = vmatpush1.bf16.msra.mxu0 0
    %692 = vmatprep.subr.bf16.mxu0 0
    %693 = vmatpush1.bf16.msra.mxu0 0
    %694 = vmatprep.subr.bf16.mxu0 0
    %695 = vmatpush1.bf16.msra.mxu0 0
    %696 = vmatprep.subr.bf16.mxu0 0
    %697 = vmatpush1.bf16.msra.mxu0 0
    %698 = vmatprep.subr.bf16.mxu0 0
    %699 = vmatpush1.bf16.msra.mxu0 0
    %700 = vmatprep.subr.bf16.mxu0 0
    %701 = vmatpush1.bf16.msra.mxu0 0
    %702 = vmatprep.subr.bf16.mxu0 0
    %703 = vmatpush1.bf16.msra.mxu0 0
    %704 = vmatprep.subr.bf16.mxu0 0
    %705 = vmatpush1.bf16.msra.mxu0 0
    %706 = vmatprep.subr.bf16.mxu0 0
    %707 = vmatpush1.bf16.msra.mxu0 0
    %708 = vmatprep.subr.bf16.mxu0 0
    %709 = vmatpush1.bf16.msra.mxu0 0
    %710 = vmatprep.mubr.bf16.mxu0 0
    %711 = vmatmul.mubr.bf16.gmra.mrb[0].mxu0 %v655
    %v712 = vpop.f32.mrb[0].mxu0
    %v713 = vadd.f32 %v580, %v712
    %v714 = vpop.f32.mrb[0].mxu0
    %v715 = vpop.f32.mrb[0].mxu0
    %v716 = vadd.f32 %v583, %v715
    %v717 = vpop.f32.mrb[0].mxu0
    %718 = vmatprep.mubr.bf16.mxu0 0
    %719 = vmatmul.mubr.bf16.gmra.mrb[0].mxu0 %v658
    %v720 = vpop.f32.mrb[0].mxu0
    %v721 = vadd.f32 %v588, %v720
    %v722 = vpop.f32.mrb[0].mxu0
    %v723 = vpop.f32.mrb[0].mxu0
    %v724 = vadd.f32 %v591, %v723
    %v725 = vpop.f32.mrb[0].mxu0
    %726 = vmatprep.mubr.bf16.mxu0 0
    %727 = vmatmul.mubr.bf16.gmra.mrb[0].mxu0 %v661
    %v728 = vpop.f32.mrb[0].mxu0
    %v729 = vadd.f32 %v596, %v728
    %v730 = vpop.f32.mrb[0].mxu0
    %v731 = vpop.f32.mrb[0].mxu0
    %v732 = vadd.f32 %v599, %v731
    %v733 = vpop.f32.mrb[0].mxu0
    %734 = vmatprep.mubr.bf16.mxu0 0
    %735 = vmatmul.mubr.bf16.gmra.mrb[0].mxu0 %v664
    %v736 = vpop.f32.mrb[0].mxu0
    %v737 = vadd.f32 %v604, %v736
    %v738 = vpop.f32.mrb[0].mxu0
    %v739 = vpop.f32.mrb[0].mxu0
    %v740 = vadd.f32 %v607, %v739
    %v741 = vpop.f32.mrb[0].mxu0
    %742 = vmatprep.mubr.bf16.mxu0 0
    %743 = vmatmul.mubr.bf16.gmra.mrb[0].mxu0 %v667
    %v744 = vpop.f32.mrb[0].mxu0
    %v745 = vadd.f32 %v612, %v744
    %v746 = vpop.f32.mrb[0].mxu0
    %v747 = vpop.f32.mrb[0].mxu0
    %v748 = vadd.f32 %v615, %v747
    %v749 = vpop.f32.mrb[0].mxu0
    %750 = vmatprep.mubr.bf16.mxu0 0
    %751 = vmatmul.mubr.bf16.gmra.mrb[0].mxu0 %v670
    %v752 = vpop.f32.mrb[0].mxu0
    %v753 = vadd.f32 %v620, %v752
    %v754 = vpop.f32.mrb[0].mxu0
    %v755 = vpop.f32.mrb[0].mxu0
    %v756 = vadd.f32 %v623, %v755
    %v757 = vpop.f32.mrb[0].mxu0
    %758 = vmatprep.mubr.bf16.mxu0 0
    %759 = vmatmul.mubr.bf16.gmra.mrb[0].mxu0 %v673
    %v760 = vpop.f32.mrb[0].mxu0
    %v761 = vadd.f32 %v628, %v760
    %v762 = vpop.f32.mrb[0].mxu0
    %v763 = vpop.f32.mrb[0].mxu0
    %v764 = vadd.f32 %v631, %v763
    %v765 = vpop.f32.mrb[0].mxu0
    %766 = vmatprep.mubr.bf16.mxu0 0
    %767 = vmatmul.mubr.bf16.gmra.mrb[0].mxu0 %v676
    %v768 = vpop.f32.mrb[0].mxu0
    %v769 = vadd.f32 %v636, %v768
    %v770 = vpop.f32.mrb[0].mxu0
    %v771 = vpop.f32.mrb[0].mxu0
    %v772 = vadd.f32 %v639, %v771
    %v773 = vpop.f32.mrb[0].mxu0
    %774 = vdwg.mxu0
    %v775 = vld [vmem:[%s8] sm:$0x1]
    %v777 = vlaneseq
    %v778 = vshrl.u32 %v777, 7
    %v779 = vsub.s32 0, %v778
    %v780 = vrot.slane %v775, %v779
    %v782 = vadd.f32 %v713, %v780
    %v783 = vadd.f32 %v716, %v780
    %v784 = vadd.f32 %v721, %v780
    %v785 = vadd.f32 %v724, %v780
    %v786 = vadd.f32 %v729, %v780
    %v787 = vadd.f32 %v732, %v780
    %v788 = vadd.f32 %v737, %v780
    %v789 = vadd.f32 %v740, %v780
    %v790 = vadd.f32 %v745, %v780
    %v791 = vadd.f32 %v748, %v780
    %v792 = vadd.f32 %v753, %v780
    %v793 = vadd.f32 %v756, %v780
    %v794 = vadd.f32 %v761, %v780
    %v795 = vadd.f32 %v764, %v780
    %v796 = vadd.f32 %v769, %v780
    %v797 = vadd.f32 %v772, %v780
    %v798 = vmax.f32 %v782, 0.0
    %v799 = vmax.f32 %v783, 0.0
    %v800 = vmax.f32 %v784, 0.0
    %v801 = vmax.f32 %v785, 0.0
    %v802 = vmax.f32 %v786, 0.0
    %v803 = vmax.f32 %v787, 0.0
    %v804 = vmax.f32 %v788, 0.0
    %v805 = vmax.f32 %v789, 0.0
    %v806 = vmax.f32 %v790, 0.0
    %v807 = vmax.f32 %v791, 0.0
    %v808 = vmax.f32 %v792, 0.0
    %v809 = vmax.f32 %v793, 0.0
    %v810 = vmax.f32 %v794, 0.0
    %v811 = vmax.f32 %v795, 0.0
    %v812 = vmax.f32 %v796, 0.0
    %v813 = vmax.f32 %v797, 0.0
    %v814 = vld [vmem:[%s9] sm:$0x1]
    %v815 = vpack.c.bf16 %v799, %v798
    %v816 = vpack.c.bf16 %v801, %v800
    %v817 = vpack.c.bf16 %v803, %v802
    %v818 = vpack.c.bf16 %v805, %v804
    %v819 = vpack.c.bf16 %v807, %v806
    %v820 = vpack.c.bf16 %v809, %v808
    %v821 = vpack.c.bf16 %v811, %v810
    %v822 = vpack.c.bf16 %v813, %v812
    %v823 = vld [vmem:[#allocation2] sm:$0x1]
    %825 = vset.pattern.permute.xlu0 0
    %826 = vperm.xlu0 %825, %v823
    %v827 = vpop.permute.xlu0 %826
    %v829 = vlaneseq
    %v830 = vshrl.u32 %v829, 7
    %v831 = vsub.s32 0, %v830
    %v832 = vrot.slane %v827, %v831
    %v834 = vsel %vm306, %v814, 0
    %v837 = vsel %vm306, %v815, 0
    %v840 = vsel %vm306, %v816, 0
    %v843 = vsel %vm306, %v817, 0
    %v846 = vsel %vm306, %v818, 0
    %v849 = vsel %vm306, %v819, 0
    %v852 = vsel %vm306, %v820, 0
    %v855 = vsel %vm306, %v821, 0
    %v858 = vsel %vm306, %v822, 0
    %860 = vmatprep.subr.bf16.mxu0 0
    %861 = vmatpush1.bf16.xpose.msra.mxu0 %v837
    %862 = vmatprep.subr.bf16.mxu0 0
    %863 = vmatpush1.bf16.xpose.msra.mxu0 %v840
    %864 = vmatprep.subr.bf16.mxu0 0
    %865 = vmatpush1.bf16.xpose.msra.mxu0 %v843
    %866 = vmatprep.subr.bf16.mxu0 0
    %867 = vmatpush1.bf16.xpose.msra.mxu0 %v846
    %868 = vmatprep.subr.bf16.mxu0 0
    %869 = vmatpush1.bf16.xpose.msra.mxu0 %v849
    %870 = vmatprep.subr.bf16.mxu0 0
    %871 = vmatpush1.bf16.xpose.msra.mxu0 %v852
    %872 = vmatprep.subr.bf16.mxu0 0
    %873 = vmatpush1.bf16.xpose.msra.mxu0 %v855
    %874 = vmatprep.subr.bf16.mxu0 0
    %875 = vmatpush1.bf16.xpose.msra.mxu0 %v858
    %876 = vmatprep.subr.bf16.mxu0 0
    %877 = vmatpush1.bf16.xpose.msra.mxu0 0
    %878 = vmatprep.subr.bf16.mxu0 0
    %879 = vmatpush1.bf16.xpose.msra.mxu0 0
    %880 = vmatprep.subr.bf16.mxu0 0
    %881 = vmatpush1.bf16.xpose.msra.mxu0 0
    %882 = vmatprep.subr.bf16.mxu0 0
    %883 = vmatpush1.bf16.xpose.msra.mxu0 0
    %884 = vmatprep.subr.bf16.mxu0 0
    %885 = vmatpush1.bf16.xpose.msra.mxu0 0
    %886 = vmatprep.subr.bf16.mxu0 0
    %887 = vmatpush1.bf16.xpose.msra.mxu0 0
    %888 = vmatprep.subr.bf16.mxu0 0
    %889 = vmatpush1.bf16.xpose.msra.mxu0 0
    %890 = vmatprep.subr.bf16.mxu0 0
    %891 = vmatpush1.bf16.xpose.msra.mxu0 0
    %892 = vmatprep.mubr.bf16.mxu0 0
    %893 = vmatmul.mubr.bf16.gmra.mrb[0].mxu0 %v834
    %v894 = vpop.f32.mrb[0].mxu0
    %v895 = vadd.f32 %v832, %v894
    %v896 = vpop.f32.mrb[0].mxu0
    %v897 = vpop.f32.mrb[0].mxu0
    %v898 = vpop.f32.mrb[0].mxu0
    %899 = vdwg.mxu0
    %900 = vst [vmem:[#allocation3] sm:$0x1] %v895
    // Predicated region
    $region46: #{tpu_custom_call.1} parent=1 // pred_check
      _
    $region47: #{tpu_custom_call.1} parent=1 // pred_check_branch
      %902 = sbr.rel (0) target = $region49
    $region48: #{tpu_custom_call.1} parent=1 // pred_region
      %s904 = ssub.s32 16, 16
      %905 = vsyncadd [#allocation4], %s904
      %s907 = sshll.u32 [#allocation3], 4
      %s908 = int_to_ptr.vmem [resolvable:$true] %s907
      %910 = dma.vmem_to_hbm [thread:$0]  %s908, 16, %s11, [#allocation4]
    $region49: #{tpu_custom_call.1} parent=1 // pred_fallthru
      _
    // Predicated region
    $region50: #{tpu_custom_call.1} parent=1 // pred_check
      _
    $region51: #{tpu_custom_call.1} parent=1 // pred_check_branch
      %912 = sbr.rel (0) target = $region53
    $region52: #{tpu_custom_call.1} parent=1 // pred_region
      %913 = dma.done [#allocation4], 16
    $region53: #{tpu_custom_call.1} parent=1 // pred_fallthru
      _
    %914 = vsyncpa [#allocation4], 1

</llo_original>
